<compile_context>
chip_gen: v6e
topology: v6e:2x2x1
jax: 0.10.0
libtpu: 0.0.40
codegen_flags: <defaults>
</compile_context>

<pallas_src>
import functools

import jax
import jax.numpy as jnp
from jax.experimental import pallas as pl
from jax.experimental.pallas import tpu as pltpu


# ----------------------------------------------------------------------------
# Fused Pallas kernel: GATConv1 (H heads, concat) -> ReLU -> GATConv2 (1 head)
# ----------------------------------------------------------------------------
def _gat_layer_fused_kernel(x_ref, w1_ref, ad1_ref, as1_ref, b1_ref,
                            w2_ref, ad2_ref, as2_ref, b2_ref, adjm_ref,
                            out_ref, adst_ref, asrc_ref, norm_ref,
                            h_scratch, *, heads1, c1, c2):
    # x_ref    : [N, Fin]        f32   node features
    # w1_ref   : [Fin, H1*C1]    bf16  layer-1 projection, heads concatenated on lanes
    # ad1_ref  : [Fin, H1]       f32   att_dst folded through W1 (per-head columns)
    # as1_ref  : [H1, Fin]       f32   att_src folded through W1 (per-head rows)
    # b1_ref   : [1, H1*C1]      f32
    # w2_ref   : [H1*C1, C2]     bf16  layer-2 projection
    # ad2_ref  : [H1*C1, 1]      f32
    # as2_ref  : [1, H1*C1]      f32
    # b2_ref   : [1, C2]         f32
    # adjm_ref : [N, N]          int8  0 where edge j->i exists (self loops incl.), -1 else
    # out_ref  : [N, C2]         f32   final node features
    # adst_ref : [N, H1]         f32   layer-1 per-node dst scores
    # asrc_ref : [H1, N]         f32   layer-1 per-node src scores
    # norm_ref : [N, H1]         f32   layer-1 per-node (row max + log softmax denom)
    # h_scratch: [N, H1*C1]      bf16  hidden features (bias+ReLU+cast fused in)
    f32 = jnp.float32
    bf16 = jnp.bfloat16
    slope = f32(0.2)
    dn = (((1,), (1,)), ((), ()))                    # contract last dims

    # Additive mask built once: 0 on edges, -1e30 elsewhere (int8 halves the N^2 DMA,
    # and each head pays only one add instead of a compare + select).
    neg_bias = adjm_ref[...].astype(f32) * f32(1e30)            # [N, N]

    x_f32 = x_ref[...]                                          # [N, Fin]
    x_bf = x_f32.astype(bf16)

    # -------- layer 1: batched projections / scores (one wide MXU op each) --------
    xp_all = jnp.dot(x_bf, w1_ref[...], preferred_element_type=f32)       # [N, H1*C1]
    adst_all = jnp.dot(x_f32, ad1_ref[...], preferred_element_type=f32)   # [N, H1]
    asrc_all = jax.lax.dot_general(as1_ref[...], x_f32, dn,
                                   preferred_element_type=f32)            # [H1, N]
    adst_ref[...] = adst_all                                    # single whole-array store
    asrc_ref[...] = asrc_all                                    # single whole-array store

    b1 = b1_ref[...]                                            # [1, H1*C1]

    def head_attend(a_dst_col, a_src_row, xp_h):
        # a_dst_col [N,1], a_src_row [1,N], xp_h [N,c] (f32)
        e = a_dst_col + a_src_row                               # [N, N]
        e = jnp.maximum(e, slope * e)                           # LeakyReLU(0.2)
        e = e + neg_bias                                        # additive adjacency mask
        e_max = jnp.max(e, axis=-1, keepdims=True)              # [N, 1]
        p = jnp.exp(e - e_max)                                  # masked entries -> exactly 0
        denom = jnp.sum(p, axis=-1, keepdims=True)              # [N, 1], >= 1 (self loops)
        agg = jnp.dot(p.astype(bf16), xp_h.astype(bf16),
                      preferred_element_type=f32)               # [N, c]  bf16 in / f32 acc
        agg = agg / denom                                       # exact post-agg normalization
        return agg, e_max + jnp.log(denom)

    for h in range(heads1):                                     # tiny static head count
        agg, nrm = head_attend(adst_all[:, h:h + 1],
                               asrc_all[h:h + 1, :],
                               xp_all[:, h * c1:(h + 1) * c1])
        # bias + ReLU + bf16 cast fused into the scratch write (no second hidden pass)
        h_scratch[:, h * c1:(h + 1) * c1] = jnp.maximum(
            agg + b1[:, h * c1:(h + 1) * c1], 0.0).astype(bf16)
        norm_ref[:, h:h + 1] = nrm

    hid_bf = h_scratch[...]                                     # [N, H1*C1] bf16
    hid_f32 = hid_bf.astype(f32)                                # tiny; keeps score dots f32

    # -------- layer 2: single head; its attention stats never leave VMEM --------
    xp2 = jnp.dot(hid_bf, w2_ref[...], preferred_element_type=f32)        # [N, C2]
    adst2 = jnp.dot(hid_f32, ad2_ref[...], preferred_element_type=f32)    # [N, 1]
    asrc2 = jax.lax.dot_general(as2_ref[...], hid_f32, dn,
                                preferred_element_type=f32)               # [1, N]
    agg2, _ = head_attend(adst2, asrc2, xp2)
    out_ref[...] = agg2 + b2_ref[...]


# ----------------------------------------------------------------------------
# Graph preprocessing (hoisted out of the per-call jit path; once per graph)
# ----------------------------------------------------------------------------
def build_graph(edge_index, num_nodes):
    src, dst = edge_index[0], edge_index[1]
    loops = jnp.arange(num_nodes, dtype=edge_index.dtype)
    src_sl = jnp.concatenate([src, loops])
    dst_sl = jnp.concatenate([dst, loops])
    edge_index_sl = jnp.stack([src_sl, dst_sl])                 # [2, E+N]
    # int8 additive-mask adjacency: 0 where edge j->i exists, -1 elsewhere.
    adj_bias = jnp.full((num_nodes, num_nodes), -1, jnp.int8).at[dst_sl, src_sl].set(0)
    # TODO(synk): duplicate edges collapse to one adjacency entry; PyG's sparse
    # softmax would count multi-edges as separate messages.
    return edge_index_sl, adj_bias


# ----------------------------------------------------------------------------
# GATLayer forward (glue JAX around the single fused Pallas call)
# ----------------------------------------------------------------------------
@jax.jit
def gat_layer_forward(params, x, edge_index_sl, adj_bias):
    N = x.shape[0]
    W1, as1, ad1, b1 = params["W1"], params["as1"], params["ad1"], params["b1"]
    W2, as2, ad2, b2 = params["W2"], params["as2"], params["ad2"], params["b2"]
    H1, Fin, C1 = W1.shape
    _, Fin2, C2 = W2.shape
    bf16 = jnp.bfloat16

    # Heads concatenated lane-contiguously; att vectors folded through W.
    # Projections are bf16 for the MXU; the folded score vectors stay f32 (tiny)
    # so the returned attention stats are not double-rounded.
    w1_cat = jnp.transpose(W1, (1, 0, 2)).reshape(Fin, H1 * C1).astype(bf16)
    ad1_fold = jnp.einsum("hfc,hoc->fh", W1, ad1)               # [Fin, H1]  f32
    as1_fold = jnp.einsum("hfc,hoc->hf", W1, as1)               # [H1, Fin]  f32
    w2_cat = jnp.transpose(W2, (1, 0, 2)).reshape(Fin2, C2).astype(bf16)
    ad2_fold = jnp.einsum("hfc,hoc->fh", W2, ad2)               # [Fin2, 1]  f32
    as2_fold = jnp.einsum("hfc,hoc->hf", W2, as2)               # [1, Fin2]  f32

    kernel = functools.partial(_gat_layer_fused_kernel,
                               heads1=int(H1), c1=int(C1), c2=int(C2))
    out, adst1, asrc1, norm1 = pl.pallas_call(
        kernel,
        out_shape=(
            jax.ShapeDtypeStruct((N, C2), jnp.float32),   # final node features
            jax.ShapeDtypeStruct((N, H1), jnp.float32),   # per-node dst scores (layer 1)
            jax.ShapeDtypeStruct((H1, N), jnp.float32),   # per-node src scores (layer 1)
            jax.ShapeDtypeStruct((N, H1), jnp.float32),   # per-node max + log-denom
        ),
        scratch_shapes=[pltpu.VMEM((N, H1 * C1), jnp.bfloat16)],
    )(x.astype(jnp.float32), w1_cat, ad1_fold, as1_fold, b1,
      w2_cat, ad2_fold, as2_fold, b2, adj_bias)

    # Per-edge attention coefficients (PyG layout [E+N, H1]) reconstructed from the
    # O(N*H) per-node stats — no dense [H, N, N] alpha is ever materialized.
    src_sl, dst_sl = edge_index_sl[0], edge_index_sl[1]
    a_d = adst1[dst_sl]                                   # [E+N, H1]
    a_s = jnp.transpose(asrc1)[src_sl]                    # [E+N, H1]
    e_edge = a_d + a_s
    e_edge = jnp.maximum(e_edge, 0.2 * e_edge)            # same LeakyReLU form as kernel
    alpha_edges = jnp.exp(e_edge - norm1[dst_sl])

    att_tuple = (edge_index_sl, alpha_edges)
    # TODO(synk): the PyTorch module forwards `weights` as GATConv edge_attr, but
    # edge_dim is not configured in __init__, so that path is inert; edge weights
    # are ignored here as well (weights=None).
    return att_tuple, out


# ----------------------------------------------------------------------------
# Deterministic parameter init (shapes follow PyG GATConv)
# ----------------------------------------------------------------------------
def init_params(key, in_channels, hidden_channels, out_channels, heads):
    ks = jax.random.split(key, 6)

    def glorot(k, shape, fan_in, fan_out):
        lim = jnp.sqrt(6.0 / (fan_in + fan_out))
        return jax.random.uniform(k, shape, jnp.float32, -lim, lim)

    H1, C1 = heads, hidden_channels
    H2, C2 = 1, out_channels
    Fin2 = hidden_channels * heads
    return {
        # layer 1: lin weight [H, Fin, C], att_src/att_dst [H, 1, C], bias [1, H*C]
        "W1":  glorot(ks[0], (H1, in_channels, C1), in_channels, H1 * C1),
        "as1": glorot(ks[1], (H1, 1, C1), C1, 1),
        "ad1": glorot(ks[2], (H1, 1, C1), C1, 1),
        "b1":  jnp.zeros((1, H1 * C1), jnp.float32),
        # layer 2 (heads=1)
        "W2":  glorot(ks[3], (H2, Fin2, C2), Fin2, H2 * C2),
        "as2": glorot(ks[4], (H2, 1, C2), C2, 1),
        "ad2": glorot(ks[5], (H2, 1, C2), C2, 1),
        "b2":  jnp.zeros((1, H2 * C2), jnp.float32),
    }


if __name__ == "__main__":
    key = jax.random.PRNGKey(0)
    k_param, k_x = jax.random.split(key)

    N = 16                 # nodes
    in_channels = 8
    hidden_channels = 16
    out_channels = 8
    heads = 2

    params = init_params(k_param, in_channels, hidden_channels, out_channels, heads)
    x = jax.random.normal(k_x, (N, in_channels), jnp.float32)

    # deterministic small graph: bidirectional ring (no self loops / duplicates in input)
    fwd = jnp.arange(N, dtype=jnp.int32)
    src = jnp.concatenate([fwd, (fwd + 1) % N])
    dst = jnp.concatenate([(fwd + 1) % N, fwd])
    edge_index = jnp.stack([src, dst])                    # [2, 2N]

    # graph structure built once (outside the jitted forward)
    edge_index_sl, adj_bias = build_graph(edge_index, N)

    (ei_sl, alpha_edges), out = gat_layer_forward(params, x, edge_index_sl, adj_bias)
    jax.block_until_ready((ei_sl, alpha_edges, out))

    # sanity: attention over incoming edges of each node sums to 1
    row_sums = jnp.zeros((N, heads), jnp.float32).at[ei_sl[1]].add(alpha_edges)
    assert bool(jnp.all(jnp.isfinite(out)))
    assert bool(jnp.allclose(row_sums, 1.0, atol=1e-4))
    assert out.shape == (N, out_channels)
    assert alpha_edges.shape == (edge_index.shape[1] + N, heads)

    print("KERNEL_OK")
</pallas_src>

<mosaic_0001>
module attributes {stable_mosaic.version = 11 : i64} {
  func.func @_gat_layer_fused_kernel(%arg0: memref<16x8xf32, #tpu.memory_space<vmem>>, %arg1: memref<8x32xbf16, #tpu.memory_space<vmem>>, %arg2: memref<8x2xf32, #tpu.memory_space<vmem>>, %arg3: memref<2x8xf32, #tpu.memory_space<vmem>>, %arg4: memref<1x32xf32, #tpu.memory_space<vmem>>, %arg5: memref<32x8xbf16, #tpu.memory_space<vmem>>, %arg6: memref<32x1xf32, #tpu.memory_space<vmem>>, %arg7: memref<1x32xf32, #tpu.memory_space<vmem>>, %arg8: memref<1x8xf32, #tpu.memory_space<vmem>>, %arg9: memref<16x16xi8, #tpu.memory_space<vmem>>, %arg10: memref<16x8xf32, #tpu.memory_space<vmem>>, %arg11: memref<16x2xf32, #tpu.memory_space<vmem>>, %arg12: memref<2x16xf32, #tpu.memory_space<vmem>>, %arg13: memref<16x2xf32, #tpu.memory_space<vmem>>, %arg14: memref<16x32xbf16, #tpu.memory_space<vmem>>) attributes {dimension_semantics = [], scalar_prefetch = 0 : i64, scratch_operands = 1 : i64, tpu.core_type = #tpu.core_type<tc>} {
    %c0 = arith.constant 0 : index
    %c0_0 = arith.constant 0 : index
    %0 = vector.load %arg9[%c0, %c0_0] : memref<16x16xi8, #tpu.memory_space<vmem>>, vector<16x16xi8>
    %1 = arith.sitofp %0 : vector<16x16xi8> to vector<16x16xf32>
    %cst = arith.constant 1.000000e+30 : f32
    %2 = vector.broadcast %cst : f32 to vector<16x16xf32>
    %3 = arith.mulf %1, %2 : vector<16x16xf32>
    %c0_1 = arith.constant 0 : index
    %c0_2 = arith.constant 0 : index
    %4 = vector.load %arg0[%c0_1, %c0_2] : memref<16x8xf32, #tpu.memory_space<vmem>>, vector<16x8xf32>
    %5 = arith.truncf %4 : vector<16x8xf32> to vector<16x8xbf16>
    %c0_3 = arith.constant 0 : index
    %c0_4 = arith.constant 0 : index
    %6 = vector.load %arg1[%c0_3, %c0_4] : memref<8x32xbf16, #tpu.memory_space<vmem>>, vector<8x32xbf16>
    %cst_5 = arith.constant dense<0.000000e+00> : vector<16x32xf32>
    %7 = tpu.matmul %5, %6, %cst_5 {dimension_numbers = #tpu.dot_dimension_numbers<[1], [0], [0], [1], [0, 0, 1, 1], [], []>} : vector<16x8xbf16>, vector<8x32xbf16>, vector<16x32xf32> -> vector<16x32xf32>
    %c0_6 = arith.constant 0 : index
    %c0_7 = arith.constant 0 : index
    %8 = vector.load %arg2[%c0_6, %c0_7] : memref<8x2xf32, #tpu.memory_space<vmem>>, vector<8x2xf32>
    %cst_8 = arith.constant dense<0.000000e+00> : vector<16x2xf32>
    %9 = tpu.matmul %4, %8, %cst_8 {dimension_numbers = #tpu.dot_dimension_numbers<[1], [0], [0], [1], [0, 0, 1, 1], [], []>} : vector<16x8xf32>, vector<8x2xf32>, vector<16x2xf32> -> vector<16x2xf32>
    %c0_9 = arith.constant 0 : index
    %c0_10 = arith.constant 0 : index
    %10 = vector.load %arg3[%c0_9, %c0_10] : memref<2x8xf32, #tpu.memory_space<vmem>>, vector<2x8xf32>
    %cst_11 = arith.constant dense<0.000000e+00> : vector<2x16xf32>
    %11 = tpu.matmul %10, %4, %cst_11 {dimension_numbers = #tpu.dot_dimension_numbers<[1], [1], [0], [0], [0, 0, 1, 0], [], []>} : vector<2x8xf32>, vector<16x8xf32>, vector<2x16xf32> -> vector<2x16xf32>
    %c0_12 = arith.constant 0 : index
    %c0_13 = arith.constant 0 : index
    %12 = vector.load %arg11[%c0_12, %c0_13] : memref<16x2xf32, #tpu.memory_space<vmem>>, vector<16x2xf32>
    tpu.vector_store %arg11[%c0_12, %c0_13], %9 {strides = array<i32>} : memref<16x2xf32, #tpu.memory_space<vmem>>, vector<16x2xf32>,
    %c0_14 = arith.constant 0 : index
    %c0_15 = arith.constant 0 : index
    %13 = vector.load %arg12[%c0_14, %c0_15] : memref<2x16xf32, #tpu.memory_space<vmem>>, vector<2x16xf32>
    tpu.vector_store %arg12[%c0_14, %c0_15], %11 {strides = array<i32>} : memref<2x16xf32, #tpu.memory_space<vmem>>, vector<2x16xf32>,
    %c0_16 = arith.constant 0 : index
    %c0_17 = arith.constant 0 : index
    %14 = vector.load %arg4[%c0_16, %c0_17] : memref<1x32xf32, #tpu.memory_space<vmem>>, vector<1x32xf32>
    %15 = vector.extract_strided_slice %9 {offsets = [0, 0], sizes = [16, 1], strides = [1, 1]} : vector<16x2xf32> to vector<16x1xf32>
    %16 = vector.extract_strided_slice %11 {offsets = [0, 0], sizes = [1, 16], strides = [1, 1]} : vector<2x16xf32> to vector<1x16xf32>
    %17 = vector.extract_strided_slice %7 {offsets = [0, 0], sizes = [16, 16], strides = [1, 1]} : vector<16x32xf32> to vector<16x16xf32>
    %18 = vector.broadcast %15 : vector<16x1xf32> to vector<16x16xf32>
    %19 = vector.broadcast %16 : vector<1x16xf32> to vector<16x16xf32>
    %20 = arith.addf %18, %19 : vector<16x16xf32>
    %cst_18 = arith.constant 2.000000e-01 : f32
    %21 = vector.broadcast %cst_18 : f32 to vector<16x16xf32>
    %22 = arith.mulf %21, %20 : vector<16x16xf32>
    %23 = arith.maximumf %20, %22 : vector<16x16xf32>
    %24 = arith.addf %23, %3 : vector<16x16xf32>
    %cst_19 = arith.constant dense<0xFF800000> : vector<16xf32>
    %25 = vector.multi_reduction <maximumf>, %24, %cst_19 [1] : vector<16x16xf32> to vector<16xf32>
    %26 = vector.shape_cast %25 : vector<16xf32> to vector<16x1xf32>
    %27 = vector.broadcast %26 : vector<16x1xf32> to vector<16x16xf32>
    %28 = arith.subf %24, %27 : vector<16x16xf32>
    %29 = math.exp %28 : vector<16x16xf32>
    %cst_20 = arith.constant dense<0.000000e+00> : vector<16xf32>
    %30 = vector.multi_reduction <add>, %29, %cst_20 [1] : vector<16x16xf32> to vector<16xf32>
    %31 = vector.shape_cast %30 : vector<16xf32> to vector<16x1xf32>
    %32 = arith.truncf %29 : vector<16x16xf32> to vector<16x16xbf16>
    %33 = arith.truncf %17 : vector<16x16xf32> to vector<16x16xbf16>
    %cst_21 = arith.constant dense<0.000000e+00> : vector<16x16xf32>
    %34 = tpu.matmul %32, %33, %cst_21 {dimension_numbers = #tpu.dot_dimension_numbers<[1], [0], [0], [1], [0, 0, 1, 1], [], []>} : vector<16x16xbf16>, vector<16x16xbf16>, vector<16x16xf32> -> vector<16x16xf32>
    %35 = vector.broadcast %31 : vector<16x1xf32> to vector<16x16xf32>
    %36 = arith.divf %34, %35 : vector<16x16xf32>
    %37 = math.log %31 : vector<16x1xf32>
    %38 = arith.addf %26, %37 : vector<16x1xf32>
    %39 = vector.extract_strided_slice %14 {offsets = [0, 0], sizes = [1, 16], strides = [1, 1]} : vector<1x32xf32> to vector<1x16xf32>
    %40 = vector.broadcast %39 : vector<1x16xf32> to vector<16x16xf32>
    %41 = arith.addf %36, %40 : vector<16x16xf32>
    %cst_22 = arith.constant 0.000000e+00 : f32
    %42 = vector.broadcast %cst_22 : f32 to vector<16x16xf32>
    %43 = arith.maximumf %41, %42 : vector<16x16xf32>
    %44 = arith.truncf %43 : vector<16x16xf32> to vector<16x16xbf16>
    %c0_23 = arith.constant 0 : index
    %c0_24 = arith.constant 0 : index
    %45 = vector.load %arg14[%c0_23, %c0_24] : memref<16x32xbf16, #tpu.memory_space<vmem>>, vector<16x16xbf16>
    tpu.vector_store %arg14[%c0_23, %c0_24], %44 {strides = array<i32>} : memref<16x32xbf16, #tpu.memory_space<vmem>>, vector<16x16xbf16>,
    %c0_25 = arith.constant 0 : index
    %c0_26 = arith.constant 0 : index
    %46 = vector.load %arg13[%c0_25, %c0_26] : memref<16x2xf32, #tpu.memory_space<vmem>>, vector<16x1xf32>
    tpu.vector_store %arg13[%c0_25, %c0_26], %38 {strides = array<i32>} : memref<16x2xf32, #tpu.memory_space<vmem>>, vector<16x1xf32>,
    %47 = vector.extract_strided_slice %9 {offsets = [0, 1], sizes = [16, 1], strides = [1, 1]} : vector<16x2xf32> to vector<16x1xf32>
    %48 = vector.extract_strided_slice %11 {offsets = [1, 0], sizes = [1, 16], strides = [1, 1]} : vector<2x16xf32> to vector<1x16xf32>
    %49 = vector.extract_strided_slice %7 {offsets = [0, 16], sizes = [16, 16], strides = [1, 1]} : vector<16x32xf32> to vector<16x16xf32>
    %50 = vector.broadcast %47 : vector<16x1xf32> to vector<16x16xf32>
    %51 = vector.broadcast %48 : vector<1x16xf32> to vector<16x16xf32>
    %52 = arith.addf %50, %51 : vector<16x16xf32>
    %cst_27 = arith.constant 2.000000e-01 : f32
    %53 = vector.broadcast %cst_27 : f32 to vector<16x16xf32>
    %54 = arith.mulf %53, %52 : vector<16x16xf32>
    %55 = arith.maximumf %52, %54 : vector<16x16xf32>
    %56 = arith.addf %55, %3 : vector<16x16xf32>
    %cst_28 = arith.constant dense<0xFF800000> : vector<16xf32>
    %57 = vector.multi_reduction <maximumf>, %56, %cst_28 [1] : vector<16x16xf32> to vector<16xf32>
    %58 = vector.shape_cast %57 : vector<16xf32> to vector<16x1xf32>
    %59 = vector.broadcast %58 : vector<16x1xf32> to vector<16x16xf32>
    %60 = arith.subf %56, %59 : vector<16x16xf32>
    %61 = math.exp %60 : vector<16x16xf32>
    %cst_29 = arith.constant dense<0.000000e+00> : vector<16xf32>
    %62 = vector.multi_reduction <add>, %61, %cst_29 [1] : vector<16x16xf32> to vector<16xf32>
    %63 = vector.shape_cast %62 : vector<16xf32> to vector<16x1xf32>
    %64 = arith.truncf %61 : vector<16x16xf32> to vector<16x16xbf16>
    %65 = arith.truncf %49 : vector<16x16xf32> to vector<16x16xbf16>
    %cst_30 = arith.constant dense<0.000000e+00> : vector<16x16xf32>
    %66 = tpu.matmul %64, %65, %cst_30 {dimension_numbers = #tpu.dot_dimension_numbers<[1], [0], [0], [1], [0, 0, 1, 1], [], []>} : vector<16x16xbf16>, vector<16x16xbf16>, vector<16x16xf32> -> vector<16x16xf32>
    %67 = vector.broadcast %63 : vector<16x1xf32> to vector<16x16xf32>
    %68 = arith.divf %66, %67 : vector<16x16xf32>
    %69 = math.log %63 : vector<16x1xf32>
    %70 = arith.addf %58, %69 : vector<16x1xf32>
    %71 = vector.extract_strided_slice %14 {offsets = [0, 16], sizes = [1, 16], strides = [1, 1]} : vector<1x32xf32> to vector<1x16xf32>
    %72 = vector.broadcast %71 : vector<1x16xf32> to vector<16x16xf32>
    %73 = arith.addf %68, %72 : vector<16x16xf32>
    %cst_31 = arith.constant 0.000000e+00 : f32
    %74 = vector.broadcast %cst_31 : f32 to vector<16x16xf32>
    %75 = arith.maximumf %73, %74 : vector<16x16xf32>
    %76 = arith.truncf %75 : vector<16x16xf32> to vector<16x16xbf16>
    %c0_32 = arith.constant 0 : index
    %c16 = arith.constant 16 : index
    %77 = vector.load %arg14[%c0_32, %c16] : memref<16x32xbf16, #tpu.memory_space<vmem>>, vector<16x16xbf16>
    tpu.vector_store %arg14[%c0_32, %c16], %76 {strides = array<i32>} : memref<16x32xbf16, #tpu.memory_space<vmem>>, vector<16x16xbf16>,
    %c0_33 = arith.constant 0 : index
    %c1 = arith.constant 1 : index
    %78 = vector.load %arg13[%c0_33, %c1] : memref<16x2xf32, #tpu.memory_space<vmem>>, vector<16x1xf32>
    tpu.vector_store %arg13[%c0_33, %c1], %70 {strides = array<i32>} : memref<16x2xf32, #tpu.memory_space<vmem>>, vector<16x1xf32>,
    %c0_34 = arith.constant 0 : index
    %c0_35 = arith.constant 0 : index
    %79 = vector.load %arg14[%c0_34, %c0_35] : memref<16x32xbf16, #tpu.memory_space<vmem>>, vector<16x32xbf16>
    %80 = arith.extf %79 : vector<16x32xbf16> to vector<16x32xf32>
    %c0_36 = arith.constant 0 : index
    %c0_37 = arith.constant 0 : index
    %81 = vector.load %arg5[%c0_36, %c0_37] : memref<32x8xbf16, #tpu.memory_space<vmem>>, vector<32x8xbf16>
    %cst_38 = arith.constant dense<0.000000e+00> : vector<16x8xf32>
    %82 = tpu.matmul %79, %81, %cst_38 {dimension_numbers = #tpu.dot_dimension_numbers<[1], [0], [0], [1], [0, 0, 1, 1], [], []>} : vector<16x32xbf16>, vector<32x8xbf16>, vector<16x8xf32> -> vector<16x8xf32>
    %c0_39 = arith.constant 0 : index
    %c0_40 = arith.constant 0 : index
    %83 = vector.load %arg6[%c0_39, %c0_40] : memref<32x1xf32, #tpu.memory_space<vmem>>, vector<32x1xf32>
    %cst_41 = arith.constant dense<0.000000e+00> : vector<16x1xf32>
    %84 = tpu.matmul %80, %83, %cst_41 {dimension_numbers = #tpu.dot_dimension_numbers<[1], [0], [0], [1], [0, 0, 1, 1], [], []>} : vector<16x32xf32>, vector<32x1xf32>, vector<16x1xf32> -> vector<16x1xf32>
    %c0_42 = arith.constant 0 : index
    %c0_43 = arith.constant 0 : index
    %85 = vector.load %arg7[%c0_42, %c0_43] : memref<1x32xf32, #tpu.memory_space<vmem>>, vector<1x32xf32>
    %cst_44 = arith.constant dense<0.000000e+00> : vector<1x16xf32>
    %86 = tpu.matmul %85, %80, %cst_44 {dimension_numbers = #tpu.dot_dimension_numbers<[1], [1], [0], [0], [0, 0, 1, 0], [], []>} : vector<1x32xf32>, vector<16x32xf32>, vector<1x16xf32> -> vector<1x16xf32>
    %87 = vector.broadcast %84 : vector<16x1xf32> to vector<16x16xf32>
    %88 = vector.broadcast %86 : vector<1x16xf32> to vector<16x16xf32>
    %89 = arith.addf %87, %88 : vector<16x16xf32>
    %cst_45 = arith.constant 2.000000e-01 : f32
    %90 = vector.broadcast %cst_45 : f32 to vector<16x16xf32>
    %91 = arith.mulf %90, %89 : vector<16x16xf32>
    %92 = arith.maximumf %89, %91 : vector<16x16xf32>
    %93 = arith.addf %92, %3 : vector<16x16xf32>
    %cst_46 = arith.constant dense<0xFF800000> : vector<16xf32>
    %94 = vector.multi_reduction <maximumf>, %93, %cst_46 [1] : vector<16x16xf32> to vector<16xf32>
    %95 = vector.shape_cast %94 : vector<16xf32> to vector<16x1xf32>
    %96 = vector.broadcast %95 : vector<16x1xf32> to vector<16x16xf32>
    %97 = arith.subf %93, %96 : vector<16x16xf32>
    %98 = math.exp %97 : vector<16x16xf32>
    %cst_47 = arith.constant dense<0.000000e+00> : vector<16xf32>
    %99 = vector.multi_reduction <add>, %98, %cst_47 [1] : vector<16x16xf32> to vector<16xf32>
    %100 = vector.shape_cast %99 : vector<16xf32> to vector<16x1xf32>
    %101 = arith.truncf %98 : vector<16x16xf32> to vector<16x16xbf16>
    %102 = arith.truncf %82 : vector<16x8xf32> to vector<16x8xbf16>
    %cst_48 = arith.constant dense<0.000000e+00> : vector<16x8xf32>
    %103 = tpu.matmul %101, %102, %cst_48 {dimension_numbers = #tpu.dot_dimension_numbers<[1], [0], [0], [1], [0, 0, 1, 1], [], []>} : vector<16x16xbf16>, vector<16x8xbf16>, vector<16x8xf32> -> vector<16x8xf32>
    %104 = vector.broadcast %100 : vector<16x1xf32> to vector<16x8xf32>
    %105 = arith.divf %103, %104 : vector<16x8xf32>
    %c0_49 = arith.constant 0 : index
    %c0_50 = arith.constant 0 : index
    %106 = vector.load %arg8[%c0_49, %c0_50] : memref<1x8xf32, #tpu.memory_space<vmem>>, vector<1x8xf32>
    %107 = vector.broadcast %106 : vector<1x8xf32> to vector<16x8xf32>
    %108 = arith.addf %105, %107 : vector<16x8xf32>
    %c0_51 = arith.constant 0 : index
    %c0_52 = arith.constant 0 : index
    %109 = vector.load %arg10[%c0_51, %c0_52] : memref<16x8xf32, #tpu.memory_space<vmem>>, vector<16x8xf32>
    tpu.vector_store %arg10[%c0_51, %c0_52], %108 {strides = array<i32>} : memref<16x8xf32, #tpu.memory_space<vmem>>, vector<16x8xf32>,
    return
  }
}

</mosaic_0001>

<llo_original>
// kernel: gat_layer_forward.1
$region0: #{gat_layer_forward.1}
  #allocation0 [shape = 'u32[]', space=smem, size = 0x4, offset = 0x4, fixed_abs, tag = 'smem constant byte address 0x4 - core index']
  #allocation1 [shape = 'u32[144,128]{1,0:T(1,128)}', space=vmem, size = 0x12000, scoped, tag = 'internal scratch']
  #allocation2 [shape = 'bf16[16,32]{1,0:T(8,128)(2,1)}', space=vmem, size = 0x1000, scoped, tag = 'scratch operand']
  %s0 = inlined_call_operand.vmem [shape: f32[16,8], index: 0, kind: input, shape index: {}]
  %s1 = inlined_call_operand.vmem [shape: bf16[8,32], index: 1, kind: input, shape index: {}]
  %s2 = inlined_call_operand.vmem [shape: f32[8,2], index: 2, kind: input, shape index: {}]
  %s3 = inlined_call_operand.vmem [shape: f32[2,8], index: 3, kind: input, shape index: {}]
  %s4 = inlined_call_operand.vmem [shape: f32[1,32], index: 4, kind: input, shape index: {}]
  %s5 = inlined_call_operand.vmem [shape: bf16[32,8], index: 5, kind: input, shape index: {}]
  %s6 = inlined_call_operand.vmem [shape: f32[32,1], index: 6, kind: input, shape index: {}]
  %s7 = inlined_call_operand.vmem [shape: f32[1,32], index: 7, kind: input, shape index: {}]
  %s8 = inlined_call_operand.vmem [shape: f32[1,8], index: 8, kind: input, shape index: {}]
  %s9 = inlined_call_operand.vmem [shape: s8[16,16], index: 9, kind: input, shape index: {}]
  %s10 = inlined_call_operand.vmem [shape: f32[16,8], index: 10, kind: output, shape index: {0}]
  %s11 = inlined_call_operand.vmem [shape: f32[16,2], index: 11, kind: output, shape index: {1}]
  %s12 = inlined_call_operand.vmem [shape: f32[2,16], index: 12, kind: output, shape index: {2}]
  %s13 = inlined_call_operand.vmem [shape: f32[16,2], index: 13, kind: output, shape index: {3}]
  %14 = xla_tuple %s10, %s11, %s12, %s13
  %s15 = sld [smem:[#allocation0]]
  $region74: #{gat_layer_forward.1} parent=0
    _
  %s17 = ssub.s32 1, %s15
  %s18 = scalar_select 0, %s17, %s15
  // Predicated region
  $region2: #{gat_layer_forward.1} parent=0 // pred_check
    _
  $region3: #{gat_layer_forward.1} parent=0 // pred_check_branch
    %20 = sbr.rel (0) target = $region5
  $region4: #{gat_layer_forward.1} parent=0 // pred_region
    _
  $region5: #{gat_layer_forward.1} parent=0 // pred_fallthru
    _
  // Predicated region
  $region6: #{gat_layer_forward.1} parent=0 // pred_check
    _
  $region7: #{gat_layer_forward.1} parent=0 // pred_check_branch
    %22 = sbr.rel (0) target = $region9
  $region8: #{gat_layer_forward.1} parent=0 // pred_region
    _
  $region9: #{gat_layer_forward.1} parent=0 // pred_fallthru
    _
  // Predicated region
  $region10: #{gat_layer_forward.1} parent=0 // pred_check
    _
  $region11: #{gat_layer_forward.1} parent=0 // pred_check_branch
    %24 = sbr.rel (0) target = $region13
  $region12: #{gat_layer_forward.1} parent=0 // pred_region
    _
  $region13: #{gat_layer_forward.1} parent=0 // pred_fallthru
    _
  // Predicated region
  $region14: #{gat_layer_forward.1} parent=0 // pred_check
    _
  $region15: #{gat_layer_forward.1} parent=0 // pred_check_branch
    %26 = sbr.rel (0) target = $region17
  $region16: #{gat_layer_forward.1} parent=0 // pred_region
    _
  $region17: #{gat_layer_forward.1} parent=0 // pred_fallthru
    _
  // Predicated region
  $region18: #{gat_layer_forward.1} parent=0 // pred_check
    _
  $region19: #{gat_layer_forward.1} parent=0 // pred_check_branch
    %28 = sbr.rel (0) target = $region21
  $region20: #{gat_layer_forward.1} parent=0 // pred_region
    _
  $region21: #{gat_layer_forward.1} parent=0 // pred_fallthru
    _
  // Predicated region
  $region22: #{gat_layer_forward.1} parent=0 // pred_check
    _
  $region23: #{gat_layer_forward.1} parent=0 // pred_check_branch
    %30 = sbr.rel (0) target = $region25
  $region24: #{gat_layer_forward.1} parent=0 // pred_region
    _
  $region25: #{gat_layer_forward.1} parent=0 // pred_fallthru
    _
  // Predicated region
  $region26: #{gat_layer_forward.1} parent=0 // pred_check
    _
  $region27: #{gat_layer_forward.1} parent=0 // pred_check_branch
    %32 = sbr.rel (0) target = $region29
  $region28: #{gat_layer_forward.1} parent=0 // pred_region
    _
  $region29: #{gat_layer_forward.1} parent=0 // pred_fallthru
    _
  // Predicated region
  $region30: #{gat_layer_forward.1} parent=0 // pred_check
    _
  $region31: #{gat_layer_forward.1} parent=0 // pred_check_branch
    %34 = sbr.rel (0) target = $region33
  $region32: #{gat_layer_forward.1} parent=0 // pred_region
    _
  $region33: #{gat_layer_forward.1} parent=0 // pred_fallthru
    _
  // Predicated region
  $region34: #{gat_layer_forward.1} parent=0 // pred_check
    _
  $region35: #{gat_layer_forward.1} parent=0 // pred_check_branch
    %36 = sbr.rel (0) target = $region37
  $region36: #{gat_layer_forward.1} parent=0 // pred_region
    _
  $region37: #{gat_layer_forward.1} parent=0 // pred_fallthru
    _
  // Predicated region
  $region38: #{gat_layer_forward.1} parent=0 // pred_check
    _
  $region39: #{gat_layer_forward.1} parent=0 // pred_check_branch
    %38 = sbr.rel (0) target = $region41
  $region40: #{gat_layer_forward.1} parent=0 // pred_region
    _
  $region41: #{gat_layer_forward.1} parent=0 // pred_fallthru
    _
  %v40 = vld [vmem:[%s9] sm:$0x3]
  %v41 = vld [vmem:[%s9 + $0x2] sm:$0x3]
  %v42 = vunpack.c.0.s8 %v40
  %v43 = vunpack.c.0.s8 %v41
  %v44 = vcvt.s32.f32 %v42
  %v45 = vcvt.s32.f32 %v43
  %v46 = vmul.f32 %v44, 1e+30
  %v47 = vmul.f32 %v45, 1e+30
  %v48 = vld [vmem:[%s0] sm:$0xff]
  %v49 = vld [vmem:[%s0 + $0x8] sm:$0xff]
  %v50 = vpack.c.bf16 %v49, %v48
  %v51 = vld [vmem:[%s1] sm:$0xf]
  %vm52 = vcmask 64512
  %v54 = vsel %vm52, %v50, 0
  %vm56 = vcmask 1043456
  %v58 = vsel %vm56, %v51, 0
  %60 = vmatprep.subr.bf16.mxu0 0
  %61 = vmatpush1.bf16.msra.mxu0 0
  %62 = vmatprep.subr.bf16.mxu0 0
  %63 = vmatpush1.bf16.msra.mxu0 0
  %64 = vmatprep.subr.bf16.mxu0 0
  %65 = vmatpush1.bf16.msra.mxu0 0
  %66 = vmatprep.subr.bf16.mxu0 0
  %67 = vmatpush1.bf16.msra.mxu0 0
  %68 = vmatprep.subr.bf16.mxu0 0
  %69 = vmatpush1.bf16.msra.mxu0 0
  %70 = vmatprep.subr.bf16.mxu0 0
  %71 = vmatpush1.bf16.msra.mxu0 0
  %72 = vmatprep.subr.bf16.mxu0 0
  %73 = vmatpush1.bf16.msra.mxu0 0
  %74 = vmatprep.subr.bf16.mxu0 0
  %75 = vmatpush1.bf16.msra.mxu0 %v58
  %76 = vmatprep.subr.bf16.mxu0 0
  %77 = vmatpush2.bf16.msra.mxu0 0
  %78 = vmatprep.subr.bf16.mxu0 0
  %79 = vmatpush2.bf16.msra.mxu0 0
  %80 = vmatprep.subr.bf16.mxu0 0
  %81 = vmatpush2.bf16.msra.mxu0 0
  %82 = vmatprep.subr.bf16.mxu0 0
  %83 = vmatpush2.bf16.msra.mxu0 0
  %84 = vmatprep.subr.bf16.mxu0 0
  %85 = vmatpush2.bf16.msra.mxu0 0
  %86 = vmatprep.subr.bf16.mxu0 0
  %87 = vmatpush2.bf16.msra.mxu0 0
  %88 = vmatprep.subr.bf16.mxu0 0
  %89 = vmatpush2.bf16.msra.mxu0 0
  %90 = vmatprep.subr.bf16.mxu0 0
  %91 = vmatpush2.bf16.msra.mxu0 0
  %92 = vmatprep.mubr.bf16.mxu0 0
  %93 = vmatmul.mubr.bf16.gmra.mxu0 %v54
  %v94 = vpop.f32.mrf.mxu0
  %v95 = vadd.f32 0.0, %v94
  %v96 = vpop.f32.mrf.mxu0
  %v97 = vpop.f32.mrf.mxu0
  %v98 = vadd.f32 0.0, %v97
  %v99 = vpop.f32.mrf.mxu0
  %100 = vdwg.mxu0
  %v101 = vld [vmem:[%s2] sm:$0xff]
  %v103 = vsel %vm52, %v48, 0
  %v106 = vsel %vm52, %v49, 0
  %108 = vmatprep.subr.mxu0 0.0
  %109 = vmatpush1.msra.mxu0 0.0
  %110 = vmatprep.subr.mxu0 0.0
  %111 = vmatpush1.msra.mxu0 0.0
  %112 = vmatprep.subr.mxu0 0.0
  %113 = vmatpush1.msra.mxu0 0.0
  %114 = vmatprep.subr.mxu0 0.0
  %115 = vmatpush1.msra.mxu0 0.0
  %116 = vmatprep.subr.mxu0 0.0
  %117 = vmatpush1.msra.mxu0 0.0
  %118 = vmatprep.subr.mxu0 0.0
  %119 = vmatpush1.msra.mxu0 0.0
  %120 = vmatprep.subr.mxu0 0.0
  %121 = vmatpush1.msra.mxu0 0.0
  %122 = vmatprep.subr.mxu0 0.0
  %123 = vmatpush1.msra.mxu0 0.0
  %124 = vmatprep.subr.mxu0 0.0
  %125 = vmatpush1.msra.mxu0 0.0
  %126 = vmatprep.subr.mxu0 0.0
  %127 = vmatpush1.msra.mxu0 0.0
  %128 = vmatprep.subr.mxu0 0.0
  %129 = vmatpush1.msra.mxu0 0.0
  %130 = vmatprep.subr.mxu0 0.0
  %131 = vmatpush1.msra.mxu0 0.0
  %132 = vmatprep.subr.mxu0 0.0
  %133 = vmatpush1.msra.mxu0 0.0
  %134 = vmatprep.subr.mxu0 0.0
  %135 = vmatpush1.msra.mxu0 0.0
  %136 = vmatprep.subr.mxu0 0.0
  %137 = vmatpush1.msra.mxu0 0.0
  %138 = vmatprep.subr.mxu0 0.0
  %139 = vmatpush1.msra.mxu0 %v101
  %140 = vmatprep.subr.mxu0 0.0
  %141 = vmatpush2.msra.mxu0 0.0
  %142 = vmatprep.subr.mxu0 0.0
  %143 = vmatpush2.msra.mxu0 0.0
  %144 = vmatprep.subr.mxu0 0.0
  %145 = vmatpush2.msra.mxu0 0.0
  %146 = vmatprep.subr.mxu0 0.0
  %147 = vmatpush2.msra.mxu0 0.0
  %148 = vmatprep.subr.mxu0 0.0
  %149 = vmatpush2.msra.mxu0 0.0
  %150 = vmatprep.subr.mxu0 0.0
  %151 = vmatpush2.msra.mxu0 0.0
  %152 = vmatprep.subr.mxu0 0.0
  %153 = vmatpush2.msra.mxu0 0.0
  %154 = vmatprep.subr.mxu0 0.0
  %155 = vmatpush2.msra.mxu0 0.0
  %156 = vmatprep.subr.mxu0 0.0
  %157 = vmatpush2.msra.mxu0 0.0
  %158 = vmatprep.subr.mxu0 0.0
  %159 = vmatpush2.msra.mxu0 0.0
  %160 = vmatprep.subr.mxu0 0.0
  %161 = vmatpush2.msra.mxu0 0.0
  %162 = vmatprep.subr.mxu0 0.0
  %163 = vmatpush2.msra.mxu0 0.0
  %164 = vmatprep.subr.mxu0 0.0
  %165 = vmatpush2.msra.mxu0 0.0
  %166 = vmatprep.subr.mxu0 0.0
  %167 = vmatpush2.msra.mxu0 0.0
  %168 = vmatprep.subr.mxu0 0.0
  %169 = vmatpush2.msra.mxu0 0.0
  %170 = vmatprep.subr.mxu0 0.0
  %171 = vmatpush2.msra.mxu0 0.0
  %172 = vmatprep.mubr.f32.mxu0 0.0
  %173 = vmatmul.mubr.f32.gmra.mxu0 %v103
  %v174 = vpop.f32.mrf.mxu0
  %v175 = vadd.f32 0.0, %v174
  %v176 = vpop.f32.mrf.mxu0
  %177 = vmatprep.mubr.f32.mxu0 0.0
  %178 = vmatmul.mubr.f32.gmra.mxu0 %v106
  %v179 = vpop.f32.mrf.mxu0
  %v180 = vadd.f32 0.0, %v179
  %v181 = vpop.f32.mrf.mxu0
  %182 = vdwg.mxu0
  %v183 = vld [vmem:[%s3] sm:$0x3]
  %v185 = vsel %vm52, %v183, 0
  %187 = vmatprep.subr.mxu0 0.0
  %188 = vmatpush1.xpose.msra.mxu0 0.0
  %189 = vmatprep.subr.mxu0 0.0
  %190 = vmatpush1.xpose.msra.mxu0 0.0
  %191 = vmatprep.subr.mxu0 0.0
  %192 = vmatpush1.xpose.msra.mxu0 0.0
  %193 = vmatprep.subr.mxu0 0.0
  %194 = vmatpush1.xpose.msra.mxu0 0.0
  %195 = vmatprep.subr.mxu0 0.0
  %196 = vmatpush1.xpose.msra.mxu0 0.0
  %197 = vmatprep.subr.mxu0 0.0
  %198 = vmatpush1.xpose.msra.mxu0 0.0
  %199 = vmatprep.subr.mxu0 0.0
  %200 = vmatpush1.xpose.msra.mxu0 0.0
  %201 = vmatprep.subr.mxu0 0.0
  %202 = vmatpush1.xpose.msra.mxu0 0.0
  %203 = vmatprep.subr.mxu0 0.0
  %204 = vmatpush1.xpose.msra.mxu0 0.0
  %205 = vmatprep.subr.mxu0 0.0
  %206 = vmatpush1.xpose.msra.mxu0 0.0
  %207 = vmatprep.subr.mxu0 0.0
  %208 = vmatpush1.xpose.msra.mxu0 0.0
  %209 = vmatprep.subr.mxu0 0.0
  %210 = vmatpush1.xpose.msra.mxu0 0.0
  %211 = vmatprep.subr.mxu0 0.0
  %212 = vmatpush1.xpose.msra.mxu0 0.0
  %213 = vmatprep.subr.mxu0 0.0
  %214 = vmatpush1.xpose.msra.mxu0 0.0
  %215 = vmatprep.subr.mxu0 0.0
  %216 = vmatpush1.xpose.msra.mxu0 %v106
  %217 = vmatprep.subr.mxu0 0.0
  %218 = vmatpush1.xpose.msra.mxu0 %v103
  %219 = vmatprep.subr.mxu0 0.0
  %220 = vmatpush2.xpose.msra.mxu0 0.0
  %221 = vmatprep.subr.mxu0 0.0
  %222 = vmatpush2.xpose.msra.mxu0 0.0
  %223 = vmatprep.subr.mxu0 0.0
  %224 = vmatpush2.xpose.msra.mxu0 0.0
  %225 = vmatprep.subr.mxu0 0.0
  %226 = vmatpush2.xpose.msra.mxu0 0.0
  %227 = vmatprep.subr.mxu0 0.0
  %228 = vmatpush2.xpose.msra.mxu0 0.0
  %229 = vmatprep.subr.mxu0 0.0
  %230 = vmatpush2.xpose.msra.mxu0 0.0
  %231 = vmatprep.subr.mxu0 0.0
  %232 = vmatpush2.xpose.msra.mxu0 0.0
  %233 = vmatprep.subr.mxu0 0.0
  %234 = vmatpush2.xpose.msra.mxu0 0.0
  %235 = vmatprep.subr.mxu0 0.0
  %236 = vmatpush2.xpose.msra.mxu0 0.0
  %237 = vmatprep.subr.mxu0 0.0
  %238 = vmatpush2.xpose.msra.mxu0 0.0
  %239 = vmatprep.subr.mxu0 0.0
  %240 = vmatpush2.xpose.msra.mxu0 0.0
  %241 = vmatprep.subr.mxu0 0.0
  %242 = vmatpush2.xpose.msra.mxu0 0.0
  %243 = vmatprep.subr.mxu0 0.0
  %244 = vmatpush2.xpose.msra.mxu0 0.0
  %245 = vmatprep.subr.mxu0 0.0
  %246 = vmatpush2.xpose.msra.mxu0 0.0
  %247 = vmatprep.subr.mxu0 0.0
  %248 = vmatpush2.xpose.msra.mxu0 0.0
  %249 = vmatprep.subr.mxu0 0.0
  %250 = vmatpush2.xpose.msra.mxu0 0.0
  %251 = vmatprep.mubr.f32.mxu0 0.0
  %252 = vmatmul.mubr.f32.gmra.mxu0 %v185
  %v253 = vpop.f32.mrf.mxu0
  %v254 = vadd.f32 0.0, %v253
  %v255 = vpop.f32.mrf.mxu0
  %256 = vdwg.mxu0
  %vm257 = vcmask 15360
  %258 = vst.msk [vmem:[%s11] sm:$0xff] %vm257, %v175
  %259 = vst.msk [vmem:[%s11 + $0x8] sm:$0xff] %vm257, %v180
  %vm260 = vcmask 123904
  %261 = vst.msk [vmem:[%s12] sm:$0x3] %vm260, %v254
  %v262 = vld [vmem:[%s4] sm:$0x1]
  %264 = vset.pattern.permute.xlu0 0
  %265 = vperm.xlu0 %264, %v175
  %v266 = vpop.permute.xlu0 %265
  %269 = vset.pattern.permute.xlu0 0
  %270 = vperm.xlu0 %269, %v180
  %v271 = vpop.permute.xlu0 %270
  %v273 = vlaneseq
  %v274 = vshrl.u32 %v273, 7
  %v275 = vsub.s32 0, %v274
  %v276 = vrot.slane %v254, %v275
  %v277 = vadd.f32 %v266, %v276
  %v278 = vadd.f32 %v271, %v276
  %v279 = vmul.f32 %v277, 0.2
  %v280 = vmul.f32 %v278, 0.2
  %v281 = vmax.f32 %v277, %v279
  %v282 = vmax.f32 %v278, %v280
  %v283 = vadd.f32 %v281, %v46
  %v284 = vadd.f32 %v282, %v47
  %vm285 = vcmask 130048
  %v286 = vsel %vm285, %v283, -inf
  %287 = vmax.xlane.f32.xlu0 %v286
  %v288 = vpop.xlane.xlu0 %287
  %v289 = vsel %vm285, %v284, -inf
  %290 = vmax.xlane.f32.xlu0 %v289
  %v291 = vpop.xlane.xlu0 %290
  %v292 = vsub.f32 %v283, %v288
  %v293 = vsub.f32 %v284, %v291
  %v294 = vmul.f32 %v292, 1.442695
  %v295 = vpow.pop %v294
  %v296 = vmul.f32 %v293, 1.442695
  %v297 = vpow.pop %v296
  %v298 = vsel %vm285, %v295, 0.0
  %299 = vadd.xlane.f32.xlu0 %v298
  %v300 = vpop.xlane.xlu0 %299
  %v301 = vsel %vm285, %v297, 0.0
  %302 = vadd.xlane.f32.xlu0 %v301
  %v303 = vpop.xlane.xlu0 %302
  %v304 = vpack.c.bf16 %v297, %v295
  %v305 = vpack.c.bf16 %v98, %v95
  %v307 = vsel %vm285, %v304, 0
  %309 = vmatprep.subr.bf16.mxu0 0
  %310 = vmatpush1.bf16.msra.mxu0 0
  %311 = vmatprep.subr.bf16.mxu0 0
  %312 = vmatpush1.bf16.msra.mxu0 0
  %313 = vmatprep.subr.bf16.mxu0 0
  %314 = vmatpush1.bf16.msra.mxu0 0
  %315 = vmatprep.subr.bf16.mxu0 0
  %316 = vmatpush1.bf16.msra.mxu0 0
  %317 = vmatprep.subr.bf16.mxu0 0
  %318 = vmatpush1.bf16.msra.mxu0 0
  %319 = vmatprep.subr.bf16.mxu0 0
  %320 = vmatpush1.bf16.msra.mxu0 0
  %321 = vmatprep.subr.bf16.mxu0 0
  %322 = vmatpush1.bf16.msra.mxu0 0
  %323 = vmatprep.subr.bf16.mxu0 0
  %324 = vmatpush1.bf16.msra.mxu0 %v305
  %325 = vmatprep.subr.bf16.mxu0 0
  %326 = vmatpush2.bf16.msra.mxu0 0
  %327 = vmatprep.subr.bf16.mxu0 0
  %328 = vmatpush2.bf16.msra.mxu0 0
  %329 = vmatprep.subr.bf16.mxu0 0
  %330 = vmatpush2.bf16.msra.mxu0 0
  %331 = vmatprep.subr.bf16.mxu0 0
  %332 = vmatpush2.bf16.msra.mxu0 0
  %333 = vmatprep.subr.bf16.mxu0 0
  %334 = vmatpush2.bf16.msra.mxu0 0
  %335 = vmatprep.subr.bf16.mxu0 0
  %336 = vmatpush2.bf16.msra.mxu0 0
  %337 = vmatprep.subr.bf16.mxu0 0
  %338 = vmatpush2.bf16.msra.mxu0 0
  %339 = vmatprep.subr.bf16.mxu0 0
  %340 = vmatpush2.bf16.msra.mxu0 0
  %341 = vmatprep.mubr.bf16.mxu0 0
  %342 = vmatmul.mubr.bf16.gmra.mxu0 %v307
  %v343 = vpop.f32.mrf.mxu0
  %v344 = vadd.f32 0.0, %v343
  %v345 = vpop.f32.mrf.mxu0
  %v346 = vpop.f32.mrf.mxu0
  %v347 = vadd.f32 0.0, %v346
  %v348 = vpop.f32.mrf.mxu0
  %349 = vdwg.mxu0
  %v350 = vrcp.pop %v300
  %v351 = vmul.f32 %v344, %v350
  %v352 = vrcp.pop %v303
  %v353 = vmul.f32 %v347, %v352
  %v354 = vlog2.pop %v300
  %v355 = vmul.f32 %v354, 0.6931472
  %v356 = vlog2.pop %v303
  %v357 = vmul.f32 %v356, 0.6931472
  %v358 = vadd.f32 %v288, %v355
  %v359 = vadd.f32 %v291, %v357
  %v361 = vlaneseq
  %v362 = vshrl.u32 %v361, 7
  %v363 = vsub.s32 0, %v362
  %v364 = vrot.slane %v262, %v363
  %v366 = vadd.f32 %v351, %v364
  %v367 = vadd.f32 %v353, %v364
  %v368 = vmax.f32 %v366, 0.0
  %v369 = vmax.f32 %v367, 0.0
  %v370 = vpack.c.bf16 %v369, %v368
  %v372 = vunpack.c.l.b16 %v370
  %v373 = vunpack.c.h.b16 %v370
  %v374 = vpack.c.b16 %v372, %v372
  %v375 = vpack.c.b16 %v373, %v373
  %vm378 = vcmask 125952
  %379 = vst.msk [vmem:[#allocation2] sm:$0xf] %vm378, %v374
  %380 = vst.msk [vmem:[#allocation2 + $0x4] sm:$0xf] %vm378, %v375
  %vm381 = vcmask 7168
  %382 = vst.msk [vmem:[%s13] sm:$0xff] %vm381, %v358
  %383 = vst.msk [vmem:[%s13 + $0x8] sm:$0xff] %vm381, %v359
  %384 = vset.pattern.permute.xlu0 1
  %385 = vperm.xlu0 %384, %v175
  %v386 = vpop.permute.xlu0 %385
  %388 = vset.pattern.permute.xlu0 1
  %389 = vperm.xlu0 %388, %v180
  %v390 = vpop.permute.xlu0 %389
  %v392 = vlaneseq
  %v393 = vshrl.u32 %v392, 7
  %v394 = vsub.s32 1, %v393
  %v395 = vrot.slane %v254, %v394
  %v396 = vadd.f32 %v386, %v395
  %v397 = vadd.f32 %v390, %v395
  %v398 = vmul.f32 %v396, 0.2
  %v399 = vmul.f32 %v397, 0.2
  %v400 = vmax.f32 %v396, %v398
  %v401 = vmax.f32 %v397, %v399
  %v402 = vadd.f32 %v400, %v46
  %v403 = vadd.f32 %v401, %v47
  %v404 = vsel %vm285, %v402, -inf
  %405 = vmax.xlane.f32.xlu0 %v404
  %v406 = vpop.xlane.xlu0 %405
  %v407 = vsel %vm285, %v403, -inf
  %408 = vmax.xlane.f32.xlu0 %v407
  %v409 = vpop.xlane.xlu0 %408
  %v410 = vsub.f32 %v402, %v406
  %v411 = vsub.f32 %v403, %v409
  %v412 = vmul.f32 %v410, 1.442695
  %v413 = vpow.pop %v412
  %v414 = vmul.f32 %v411, 1.442695
  %v415 = vpow.pop %v414
  %v416 = vsel %vm285, %v413, 0.0
  %417 = vadd.xlane.f32.xlu0 %v416
  %v418 = vpop.xlane.xlu0 %417
  %v419 = vsel %vm285, %v415, 0.0
  %420 = vadd.xlane.f32.xlu0 %v419
  %v421 = vpop.xlane.xlu0 %420
  %v422 = vpack.c.bf16 %v415, %v413
  %424 = vrot.lane.b32.xlu0 %v305, 112
  %v425 = vpop.permute.xlu0 %424
  %v428 = vsel %vm285, %v422, 0
  %430 = vmatprep.subr.bf16.mxu0 0
  %431 = vmatpush1.bf16.msra.mxu0 0
  %432 = vmatprep.subr.bf16.mxu0 0
  %433 = vmatpush1.bf16.msra.mxu0 0
  %434 = vmatprep.subr.bf16.mxu0 0
  %435 = vmatpush1.bf16.msra.mxu0 0
  %436 = vmatprep.subr.bf16.mxu0 0
  %437 = vmatpush1.bf16.msra.mxu0 0
  %438 = vmatprep.subr.bf16.mxu0 0
  %439 = vmatpush1.bf16.msra.mxu0 0
  %440 = vmatprep.subr.bf16.mxu0 0
  %441 = vmatpush1.bf16.msra.mxu0 0
  %442 = vmatprep.subr.bf16.mxu0 0
  %443 = vmatpush1.bf16.msra.mxu0 0
  %444 = vmatprep.subr.bf16.mxu0 0
  %445 = vmatpush1.bf16.msra.mxu0 %v425
  %446 = vmatprep.subr.bf16.mxu0 0
  %447 = vmatpush2.bf16.msra.mxu0 0
  %448 = vmatprep.subr.bf16.mxu0 0
  %449 = vmatpush2.bf16.msra.mxu0 0
  %450 = vmatprep.subr.bf16.mxu0 0
  %451 = vmatpush2.bf16.msra.mxu0 0
  %452 = vmatprep.subr.bf16.mxu0 0
  %453 = vmatpush2.bf16.msra.mxu0 0
  %454 = vmatprep.subr.bf16.mxu0 0
  %455 = vmatpush2.bf16.msra.mxu0 0
  %456 = vmatprep.subr.bf16.mxu0 0
  %457 = vmatpush2.bf16.msra.mxu0 0
  %458 = vmatprep.subr.bf16.mxu0 0
  %459 = vmatpush2.bf16.msra.mxu0 0
  %460 = vmatprep.subr.bf16.mxu0 0
  %461 = vmatpush2.bf16.msra.mxu0 0
  %462 = vmatprep.mubr.bf16.mxu0 0
  %463 = vmatmul.mubr.bf16.gmra.mxu0 %v428
  %v464 = vpop.f32.mrf.mxu0
  %v465 = vadd.f32 0.0, %v464
  %v466 = vpop.f32.mrf.mxu0
  %v467 = vpop.f32.mrf.mxu0
  %v468 = vadd.f32 0.0, %v467
  %v469 = vpop.f32.mrf.mxu0
  %470 = vdwg.mxu0
  %v471 = vrcp.pop %v418
  %v472 = vmul.f32 %v465, %v471
  %v473 = vrcp.pop %v421
  %v474 = vmul.f32 %v468, %v473
  %v475 = vlog2.pop %v418
  %v476 = vmul.f32 %v475, 0.6931472
  %v477 = vlog2.pop %v421
  %v478 = vmul.f32 %v477, 0.6931472
  %v479 = vadd.f32 %v406, %v476
  %v480 = vadd.f32 %v409, %v478
  %481 = vrot.lane.b32.xlu0 %v364, 112
  %v482 = vpop.permute.xlu0 %481
  %v484 = vadd.f32 %v472, %v482
  %v485 = vadd.f32 %v474, %v482
  %v486 = vmax.f32 %v484, 0.0
  %v487 = vmax.f32 %v485, 0.0
  %v488 = vpack.c.bf16 %v487, %v486
  %v490 = vunpack.c.l.b16 %v488
  %v491 = vunpack.c.h.b16 %v488
  %v492 = vpack.c.b16 %v490, %v490
  %v493 = vpack.c.b16 %v491, %v491
  %494 = vrot.lane.b32.xlu0 %v492, 16
  %v495 = vpop.permute.xlu0 %494
  %496 = vrot.lane.b32.xlu0 %v493, 16
  %v497 = vpop.permute.xlu0 %496
  %vm500 = vcmask 257152
  %501 = vst.msk [vmem:[#allocation2] sm:$0xf] %vm500, %v495
  %502 = vst.msk [vmem:[#allocation2 + $0x4] sm:$0xf] %vm500, %v497
  %vm503 = vcmask 15368
  %504 = vst.msk [vmem:[%s13] sm:$0xff] %vm503, %v479
  %505 = vst.msk [vmem:[%s13 + $0x8] sm:$0xff] %vm503, %v480
  %v506 = vld [vmem:[#allocation2] sm:$0xf]
  %v507 = vld [vmem:[#allocation2 + $0x4] sm:$0xf]
  %v508 = vunpack.c.l.bf16 %v506
  %v509 = vunpack.c.l.bf16 %v507
  %v510 = vld [vmem:[%s5] sm:$0xf]
  %v511 = vld [vmem:[%s5 + $0x4] sm:$0xf]
  %v512 = vld [vmem:[%s5 + $0x8] sm:$0xf]
  %v513 = vld [vmem:[%s5 + $0xc] sm:$0xf]
  %v516 = vunpack.c.l.b16 %v506
  %v517 = vunpack.c.l.b16 %v507
  %v518 = vpack.c.b16 %v517, %v516
  %v523 = vunpack.c.l.b16 %v510
  %v524 = vunpack.c.l.b16 %v511
  %v525 = vunpack.c.l.b16 %v512
  %v526 = vunpack.c.l.b16 %v513
  %v527 = vpack.c.b16 %v524, %v523
  %v528 = vpack.c.b16 %v526, %v525
  %vm531 = vcmask 261120
  %v533 = vsel %vm531, %v518, 0
  %535 = vmatprep.subr.bf16.mxu0 0
  %536 = vmatpush1.bf16.msra.mxu0 0
  %537 = vmatprep.subr.bf16.mxu0 0
  %538 = vmatpush1.bf16.msra.mxu0 0
  %539 = vmatprep.subr.bf16.mxu0 0
  %540 = vmatpush1.bf16.msra.mxu0 0
  %541 = vmatprep.subr.bf16.mxu0 0
  %542 = vmatpush1.bf16.msra.mxu0 0
  %543 = vmatprep.subr.bf16.mxu0 0
  %544 = vmatpush1.bf16.msra.mxu0 0
  %545 = vmatprep.subr.bf16.mxu0 0
  %546 = vmatpush1.bf16.msra.mxu0 0
  %547 = vmatprep.subr.bf16.mxu0 0
  %548 = vmatpush1.bf16.msra.mxu0 %v528
  %549 = vmatprep.subr.bf16.mxu0 0
  %550 = vmatpush1.bf16.msra.mxu0 %v527
  %551 = vmatprep.subr.bf16.mxu0 0
  %552 = vmatpush2.bf16.msra.mxu0 0
  %553 = vmatprep.subr.bf16.mxu0 0
  %554 = vmatpush2.bf16.msra.mxu0 0
  %555 = vmatprep.subr.bf16.mxu0 0
  %556 = vmatpush2.bf16.msra.mxu0 0
  %557 = vmatprep.subr.bf16.mxu0 0
  %558 = vmatpush2.bf16.msra.mxu0 0
  %559 = vmatprep.subr.bf16.mxu0 0
  %560 = vmatpush2.bf16.msra.mxu0 0
  %561 = vmatprep.subr.bf16.mxu0 0
  %562 = vmatpush2.bf16.msra.mxu0 0
  %563 = vmatprep.subr.bf16.mxu0 0
  %564 = vmatpush2.bf16.msra.mxu0 0
  %565 = vmatprep.subr.bf16.mxu0 0
  %566 = vmatpush2.bf16.msra.mxu0 0
  %567 = vmatprep.mubr.bf16.mxu0 0
  %568 = vmatmul.mubr.bf16.gmra.mxu0 %v533
  %v569 = vpop.f32.mrf.mxu0
  %v570 = vadd.f32 0.0, %v569
  %v571 = vpop.f32.mrf.mxu0
  %v572 = vpop.f32.mrf.mxu0
  %v573 = vadd.f32 0.0, %v572
  %v574 = vpop.f32.mrf.mxu0
  %575 = vdwg.mxu0
  %v576 = vld [vmem:[%s6] sm:$0xff]
  %v577 = vld [vmem:[%s6 + $0x8] sm:$0xff]
  %v578 = vld [vmem:[%s6 + $0x10] sm:$0xff]
  %v579 = vld [vmem:[%s6 + $0x18] sm:$0xff]
  %v581 = vsel %vm531, %v508, 0
  %v584 = vsel %vm531, %v509, 0
  %586 = vmatprep.subr.mxu0 0.0
  %587 = vmatpush1.msra.mxu0 0.0
  %588 = vmatprep.subr.mxu0 0.0
  %589 = vmatpush1.msra.mxu0 0.0
  %590 = vmatprep.subr.mxu0 0.0
  %591 = vmatpush1.msra.mxu0 0.0
  %592 = vmatprep.subr.mxu0 0.0
  %593 = vmatpush1.msra.mxu0 0.0
  %594 = vmatprep.subr.mxu0 0.0
  %595 = vmatpush1.msra.mxu0 0.0
  %596 = vmatprep.subr.mxu0 0.0
  %597 = vmatpush1.msra.mxu0 0.0
  %598 = vmatprep.subr.mxu0 0.0
  %599 = vmatpush1.msra.mxu0 0.0
  %600 = vmatprep.subr.mxu0 0.0
  %601 = vmatpush1.msra.mxu0 0.0
  %602 = vmatprep.subr.mxu0 0.0
  %603 = vmatpush1.msra.mxu0 0.0
  %604 = vmatprep.subr.mxu0 0.0
  %605 = vmatpush1.msra.mxu0 0.0
  %606 = vmatprep.subr.mxu0 0.0
  %607 = vmatpush1.msra.mxu0 0.0
  %608 = vmatprep.subr.mxu0 0.0
  %609 = vmatpush1.msra.mxu0 0.0
  %610 = vmatprep.subr.mxu0 0.0
  %611 = vmatpush1.msra.mxu0 %v579
  %612 = vmatprep.subr.mxu0 0.0
  %613 = vmatpush1.msra.mxu0 %v578
  %614 = vmatprep.subr.mxu0 0.0
  %615 = vmatpush1.msra.mxu0 %v577
  %616 = vmatprep.subr.mxu0 0.0
  %617 = vmatpush1.msra.mxu0 %v576
  %618 = vmatprep.subr.mxu0 0.0
  %619 = vmatpush2.msra.mxu0 0.0
  %620 = vmatprep.subr.mxu0 0.0
  %621 = vmatpush2.msra.mxu0 0.0
  %622 = vmatprep.subr.mxu0 0.0
  %623 = vmatpush2.msra.mxu0 0.0
  %624 = vmatprep.subr.mxu0 0.0
  %625 = vmatpush2.msra.mxu0 0.0
  %626 = vmatprep.subr.mxu0 0.0
  %627 = vmatpush2.msra.mxu0 0.0
  %628 = vmatprep.subr.mxu0 0.0
  %629 = vmatpush2.msra.mxu0 0.0
  %630 = vmatprep.subr.mxu0 0.0
  %631 = vmatpush2.msra.mxu0 0.0
  %632 = vmatprep.subr.mxu0 0.0
  %633 = vmatpush2.msra.mxu0 0.0
  %634 = vmatprep.subr.mxu0 0.0
  %635 = vmatpush2.msra.mxu0 0.0
  %636 = vmatprep.subr.mxu0 0.0
  %637 = vmatpush2.msra.mxu0 0.0
  %638 = vmatprep.subr.mxu0 0.0
  %639 = vmatpush2.msra.mxu0 0.0
  %640 = vmatprep.subr.mxu0 0.0
  %641 = vmatpush2.msra.mxu0 0.0
  %642 = vmatprep.subr.mxu0 0.0
  %643 = vmatpush2.msra.mxu0 0.0
  %644 = vmatprep.subr.mxu0 0.0
  %645 = vmatpush2.msra.mxu0 0.0
  %646 = vmatprep.subr.mxu0 0.0
  %647 = vmatpush2.msra.mxu0 0.0
  %648 = vmatprep.subr.mxu0 0.0
  %649 = vmatpush2.msra.mxu0 0.0
  %650 = vmatprep.mubr.f32.mxu0 0.0
  %651 = vmatmul.mubr.f32.gmra.mxu0 %v581
  %v652 = vpop.f32.mrf.mxu0
  %v653 = vadd.f32 0.0, %v652
  %v654 = vpop.f32.mrf.mxu0
  %655 = vmatprep.mubr.f32.mxu0 0.0
  %656 = vmatmul.mubr.f32.gmra.mxu0 %v584
  %v657 = vpop.f32.mrf.mxu0
  %v658 = vadd.f32 0.0, %v657
  %v659 = vpop.f32.mrf.mxu0
  %660 = vdwg.mxu0
  %v661 = vld [vmem:[%s7] sm:$0x1]
  %v663 = vsel %vm531, %v661, 0
  %665 = vmatprep.subr.mxu0 0.0
  %666 = vmatpush1.xpose.msra.mxu0 0.0
  %667 = vmatprep.subr.mxu0 0.0
  %668 = vmatpush1.xpose.msra.mxu0 0.0
  %669 = vmatprep.subr.mxu0 0.0
  %670 = vmatpush1.xpose.msra.mxu0 0.0
  %671 = vmatprep.subr.mxu0 0.0
  %672 = vmatpush1.xpose.msra.mxu0 0.0
  %673 = vmatprep.subr.mxu0 0.0
  %674 = vmatpush1.xpose.msra.mxu0 0.0
  %675 = vmatprep.subr.mxu0 0.0
  %676 = vmatpush1.xpose.msra.mxu0 0.0
  %677 = vmatprep.subr.mxu0 0.0
  %678 = vmatpush1.xpose.msra.mxu0 0.0
  %679 = vmatprep.subr.mxu0 0.0
  %680 = vmatpush1.xpose.msra.mxu0 0.0
  %681 = vmatprep.subr.mxu0 0.0
  %682 = vmatpush1.xpose.msra.mxu0 0.0
  %683 = vmatprep.subr.mxu0 0.0
  %684 = vmatpush1.xpose.msra.mxu0 0.0
  %685 = vmatprep.subr.mxu0 0.0
  %686 = vmatpush1.xpose.msra.mxu0 0.0
  %687 = vmatprep.subr.mxu0 0.0
  %688 = vmatpush1.xpose.msra.mxu0 0.0
  %689 = vmatprep.subr.mxu0 0.0
  %690 = vmatpush1.xpose.msra.mxu0 0.0
  %691 = vmatprep.subr.mxu0 0.0
  %692 = vmatpush1.xpose.msra.mxu0 0.0
  %693 = vmatprep.subr.mxu0 0.0
  %694 = vmatpush1.xpose.msra.mxu0 %v584
  %695 = vmatprep.subr.mxu0 0.0
  %696 = vmatpush1.xpose.msra.mxu0 %v581
  %697 = vmatprep.subr.mxu0 0.0
  %698 = vmatpush2.xpose.msra.mxu0 0.0
  %699 = vmatprep.subr.mxu0 0.0
  %700 = vmatpush2.xpose.msra.mxu0 0.0
  %701 = vmatprep.subr.mxu0 0.0
  %702 = vmatpush2.xpose.msra.mxu0 0.0
  %703 = vmatprep.subr.mxu0 0.0
  %704 = vmatpush2.xpose.msra.mxu0 0.0
  %705 = vmatprep.subr.mxu0 0.0
  %706 = vmatpush2.xpose.msra.mxu0 0.0
  %707 = vmatprep.subr.mxu0 0.0
  %708 = vmatpush2.xpose.msra.mxu0 0.0
  %709 = vmatprep.subr.mxu0 0.0
  %710 = vmatpush2.xpose.msra.mxu0 0.0
  %711 = vmatprep.subr.mxu0 0.0
  %712 = vmatpush2.xpose.msra.mxu0 0.0
  %713 = vmatprep.subr.mxu0 0.0
  %714 = vmatpush2.xpose.msra.mxu0 0.0
  %715 = vmatprep.subr.mxu0 0.0
  %716 = vmatpush2.xpose.msra.mxu0 0.0
  %717 = vmatprep.subr.mxu0 0.0
  %718 = vmatpush2.xpose.msra.mxu0 0.0
  %719 = vmatprep.subr.mxu0 0.0
  %720 = vmatpush2.xpose.msra.mxu0 0.0
  %721 = vmatprep.subr.mxu0 0.0
  %722 = vmatpush2.xpose.msra.mxu0 0.0
  %723 = vmatprep.subr.mxu0 0.0
  %724 = vmatpush2.xpose.msra.mxu0 0.0
  %725 = vmatprep.subr.mxu0 0.0
  %726 = vmatpush2.xpose.msra.mxu0 0.0
  %727 = vmatprep.subr.mxu0 0.0
  %728 = vmatpush2.xpose.msra.mxu0 0.0
  %729 = vmatprep.mubr.f32.mxu0 0.0
  %730 = vmatmul.mubr.f32.gmra.mxu0 %v663
  %v731 = vpop.f32.mrf.mxu0
  %v732 = vadd.f32 0.0, %v731
  %v733 = vpop.f32.mrf.mxu0
  %734 = vdwg.mxu0
  %736 = vset.pattern.permute.xlu0 0
  %737 = vperm.xlu0 %736, %v653
  %v738 = vpop.permute.xlu0 %737
  %741 = vset.pattern.permute.xlu0 0
  %742 = vperm.xlu0 %741, %v658
  %v743 = vpop.permute.xlu0 %742
  %v745 = vlaneseq
  %v746 = vshrl.u32 %v745, 7
  %v747 = vsub.s32 0, %v746
  %v748 = vrot.slane %v732, %v747
  %v749 = vadd.f32 %v738, %v748
  %v750 = vadd.f32 %v743, %v748
  %v751 = vmul.f32 %v749, 0.2
  %v752 = vmul.f32 %v750, 0.2
  %v753 = vmax.f32 %v749, %v751
  %v754 = vmax.f32 %v750, %v752
  %v755 = vadd.f32 %v753, %v46
  %v756 = vadd.f32 %v754, %v47
  %v757 = vsel %vm285, %v755, -inf
  %758 = vmax.xlane.f32.xlu0 %v757
  %v759 = vpop.xlane.xlu0 %758
  %v760 = vsel %vm285, %v756, -inf
  %761 = vmax.xlane.f32.xlu0 %v760
  %v762 = vpop.xlane.xlu0 %761
  %v763 = vsub.f32 %v755, %v759
  %v764 = vsub.f32 %v756, %v762
  %v765 = vmul.f32 %v763, 1.442695
  %v766 = vpow.pop %v765
  %v767 = vmul.f32 %v764, 1.442695
  %v768 = vpow.pop %v767
  %v769 = vsel %vm285, %v766, 0.0
  %770 = vadd.xlane.f32.xlu0 %v769
  %v771 = vpop.xlane.xlu0 %770
  %v772 = vsel %vm285, %v768, 0.0
  %773 = vadd.xlane.f32.xlu0 %v772
  %v774 = vpop.xlane.xlu0 %773
  %v775 = vpack.c.bf16 %v768, %v766
  %v776 = vpack.c.bf16 %v573, %v570
  %v778 = vsel %vm285, %v775, 0
  %780 = vmatprep.subr.bf16.mxu0 0
  %781 = vmatpush1.bf16.msra.mxu0 0
  %782 = vmatprep.subr.bf16.mxu0 0
  %783 = vmatpush1.bf16.msra.mxu0 0
  %784 = vmatprep.subr.bf16.mxu0 0
  %785 = vmatpush1.bf16.msra.mxu0 0
  %786 = vmatprep.subr.bf16.mxu0 0
  %787 = vmatpush1.bf16.msra.mxu0 0
  %788 = vmatprep.subr.bf16.mxu0 0
  %789 = vmatpush1.bf16.msra.mxu0 0
  %790 = vmatprep.subr.bf16.mxu0 0
  %791 = vmatpush1.bf16.msra.mxu0 0
  %792 = vmatprep.subr.bf16.mxu0 0
  %793 = vmatpush1.bf16.msra.mxu0 0
  %794 = vmatprep.subr.bf16.mxu0 0
  %795 = vmatpush1.bf16.msra.mxu0 %v776
  %796 = vmatprep.subr.bf16.mxu0 0
  %797 = vmatpush2.bf16.msra.mxu0 0
  %798 = vmatprep.subr.bf16.mxu0 0
  %799 = vmatpush2.bf16.msra.mxu0 0
  %800 = vmatprep.subr.bf16.mxu0 0
  %801 = vmatpush2.bf16.msra.mxu0 0
  %802 = vmatprep.subr.bf16.mxu0 0
  %803 = vmatpush2.bf16.msra.mxu0 0
  %804 = vmatprep.subr.bf16.mxu0 0
  %805 = vmatpush2.bf16.msra.mxu0 0
  %806 = vmatprep.subr.bf16.mxu0 0
  %807 = vmatpush2.bf16.msra.mxu0 0
  %808 = vmatprep.subr.bf16.mxu0 0
  %809 = vmatpush2.bf16.msra.mxu0 0
  %810 = vmatprep.subr.bf16.mxu0 0
  %811 = vmatpush2.bf16.msra.mxu0 0
  %812 = vmatprep.mubr.bf16.mxu0 0
  %813 = vmatmul.mubr.bf16.gmra.mxu0 %v778
  %v814 = vpop.f32.mrf.mxu0
  %v815 = vadd.f32 0.0, %v814
  %v816 = vpop.f32.mrf.mxu0
  %v817 = vpop.f32.mrf.mxu0
  %v818 = vadd.f32 0.0, %v817
  %v819 = vpop.f32.mrf.mxu0
  %820 = vdwg.mxu0
  %v821 = vrcp.pop %v771
  %v822 = vmul.f32 %v815, %v821
  %v823 = vrcp.pop %v774
  %v824 = vmul.f32 %v818, %v823
  %v825 = vld [vmem:[%s8] sm:$0x1]
  %v827 = vlaneseq
  %v828 = vshrl.u32 %v827, 7
  %v829 = vsub.s32 0, %v828
  %v830 = vrot.slane %v825, %v829
  %v832 = vadd.f32 %v822, %v830
  %v833 = vadd.f32 %v824, %v830
  %834 = vst.msk [vmem:[%s10] sm:$0xff] %vm52, %v832
  %835 = vst.msk [vmem:[%s10 + $0x8] sm:$0xff] %vm52, %v833
  // Predicated region
  $region42: #{gat_layer_forward.1} parent=0 // pred_check
    _
  $region43: #{gat_layer_forward.1} parent=0 // pred_check_branch
    %837 = sbr.rel (0) target = $region45
  $region44: #{gat_layer_forward.1} parent=0 // pred_region
    _
  $region45: #{gat_layer_forward.1} parent=0 // pred_fallthru
    _
  // Predicated region
  $region46: #{gat_layer_forward.1} parent=0 // pred_check
    _
  $region47: #{gat_layer_forward.1} parent=0 // pred_check_branch
    %839 = sbr.rel (0) target = $region49
  $region48: #{gat_layer_forward.1} parent=0 // pred_region
    _
  $region49: #{gat_layer_forward.1} parent=0 // pred_fallthru
    _
  // Predicated region
  $region50: #{gat_layer_forward.1} parent=0 // pred_check
    _
  $region51: #{gat_layer_forward.1} parent=0 // pred_check_branch
    %841 = sbr.rel (0) target = $region53
  $region52: #{gat_layer_forward.1} parent=0 // pred_region
    _
  $region53: #{gat_layer_forward.1} parent=0 // pred_fallthru
    _
  // Predicated region
  $region54: #{gat_layer_forward.1} parent=0 // pred_check
    _
  $region55: #{gat_layer_forward.1} parent=0 // pred_check_branch
    %843 = sbr.rel (0) target = $region57
  $region56: #{gat_layer_forward.1} parent=0 // pred_region
    _
  $region57: #{gat_layer_forward.1} parent=0 // pred_fallthru
    _
  // Predicated region
  $region58: #{gat_layer_forward.1} parent=0 // pred_check
    _
  $region59: #{gat_layer_forward.1} parent=0 // pred_check_branch
    %845 = sbr.rel (0) target = $region61
  $region60: #{gat_layer_forward.1} parent=0 // pred_region
    _
  $region61: #{gat_layer_forward.1} parent=0 // pred_fallthru
    _
  // Predicated region
  $region62: #{gat_layer_forward.1} parent=0 // pred_check
    _
  $region63: #{gat_layer_forward.1} parent=0 // pred_check_branch
    %847 = sbr.rel (0) target = $region65
  $region64: #{gat_layer_forward.1} parent=0 // pred_region
    _
  $region65: #{gat_layer_forward.1} parent=0 // pred_fallthru
    _
  // Predicated region
  $region66: #{gat_layer_forward.1} parent=0 // pred_check
    _
  $region67: #{gat_layer_forward.1} parent=0 // pred_check_branch
    %849 = sbr.rel (0) target = $region69
  $region68: #{gat_layer_forward.1} parent=0 // pred_region
    _
  $region69: #{gat_layer_forward.1} parent=0 // pred_fallthru
    _
  // Predicated region
  $region70: #{gat_layer_forward.1} parent=0 // pred_check
    _
  $region71: #{gat_layer_forward.1} parent=0 // pred_check_branch
    %851 = sbr.rel (0) target = $region73
  $region72: #{gat_layer_forward.1} parent=0 // pred_region
    _
  $region73: #{gat_layer_forward.1} parent=0 // pred_fallthru
    _

</llo_original>
